<compile_context>
chip_gen: v7x
topology: tpu7x:2x2x1
jax: 0.10.0
libtpu: 0.0.40
codegen_flags: <defaults>
</compile_context>

<pallas_src>
import numpy as np
import jax
import jax.numpy as jnp
from jax.experimental import pallas as pl
from jax.experimental.pallas import tpu as pltpu

NODE_TYPE_SIZE = 9       # common.NodeType.SIZE
ROW_TILE = 512           # row tile (128-aligned); sweep 512-1024 per perf review
LANE = 128

_PARALLEL = pltpu.CompilerParams(dimension_semantics=("parallel",))


# ---------------------------------------------------------------------------
# Small helpers
# ---------------------------------------------------------------------------
def _fixed(shape):
    # extra *_ absorbs scalar-prefetch refs when used under PrefetchScalarGridSpec
    return pl.BlockSpec(shape, lambda i, *_: (0,) * len(shape))


def _row_spec(tile, f):
    return pl.BlockSpec((tile, f), lambda i, *_: (i, 0))


def _row_tile_for(n):
    """Prefer ROW_TILE; on smaller meshes shrink so grid >= 2 where possible."""
    if n >= 2 * ROW_TILE:
        return ROW_TILE
    half = (max(n, 2) + 1) // 2
    t = ((half + LANE - 1) // LANE) * LANE
    return max(LANE, min(ROW_TILE, t))


def _round_up(n, m):
    return ((n + m - 1) // m) * m


def _dot(x, w_ref, b_ref=None):
    """MXU dot: cast activation to the weight's dtype (bf16 or f32), f32 accumulate."""
    y = jnp.dot(x.astype(w_ref.dtype), w_ref[...], preferred_element_type=jnp.float32)
    if b_ref is not None:
        y = y + b_ref[...]
    return y


def _layernorm(y, g_ref, beta_ref):
    mu = jnp.mean(y, axis=-1, keepdims=True)
    var = jnp.mean((y - mu) ** 2, axis=-1, keepdims=True)
    return (y - mu) * jax.lax.rsqrt(var + 1e-5) * g_ref[...] + beta_ref[...]


def _row_mask(n_ref, tile):
    """(tile, 1) bool mask: True for real rows (global row id < n_real)."""
    rows = pl.program_id(0) * tile + jax.lax.broadcasted_iota(jnp.int32, (tile, 1), 0)
    return rows < n_ref[0]


# ---------------------------------------------------------------------------
# Pallas kernels
# ---------------------------------------------------------------------------
def _mlp_ln_kernel(x_ref, w0_ref, b0_ref, w1_ref, b1_ref, w2_ref, b2_ref,
                   g_ref, beta_ref, o_ref):
    """Encoder: 2-hidden-layer MLP + LayerNorm (input normalization folded into w0/b0)."""
    h = jnp.maximum(_dot(x_ref[...], w0_ref, b0_ref), 0.0)
    h = jnp.maximum(_dot(h, w1_ref, b1_ref), 0.0)
    y = _dot(h, w2_ref, b2_ref)
    o_ref[...] = _layernorm(y, g_ref, beta_ref).astype(o_ref.dtype)


def _mlp_kernel(x_ref, w0_ref, b0_ref, w1_ref, b1_ref, w2_ref, b2_ref, o_ref):
    """Decoder: MLP without LayerNorm; output normalizer folded into w2/b2 (lane-padded)."""
    h = jnp.maximum(_dot(x_ref[...], w0_ref, b0_ref), 0.0)
    h = jnp.maximum(_dot(h, w1_ref, b1_ref), 0.0)
    o_ref[...] = _dot(h, w2_ref, b2_ref).astype(o_ref.dtype)


def _edge_block_kernel(n_ref, e_ref, ns_ref, nr_ref,
                       w0e_ref, w0s_ref, w0r_ref, b0_ref,
                       w1_ref, b1_ref, w2_ref, b2_ref,
                       g_ref, beta_ref, o_ref, psum_ref):
    """Processor edge block: split-weight first layer (global term pre-folded into b0),
    fused LN + residual, pad rows zeroed, masked per-tile partial sum for the global pool."""
    e = e_ref[...]
    h = (_dot(e, w0e_ref)
         + _dot(ns_ref[...], w0s_ref)
         + _dot(nr_ref[...], w0r_ref)
         + b0_ref[...])
    h = jnp.maximum(h, 0.0)
    h = jnp.maximum(_dot(h, w1_ref, b1_ref), 0.0)
    y = _dot(h, w2_ref, b2_ref)
    out = e.astype(jnp.float32) + _layernorm(y, g_ref, beta_ref)
    out = jnp.where(_row_mask(n_ref, o_ref.shape[0]), out, 0.0)
    o_ref[...] = out.astype(o_ref.dtype)
    psum_ref[...] = jnp.sum(out, axis=0, keepdims=True).reshape(psum_ref.shape)


def _node_block_kernel(n_ref, x_ref, agg_ref,
                       w0n_ref, w0a_ref, b0_ref,
                       w1_ref, b1_ref, w2_ref, b2_ref,
                       g_ref, beta_ref, o_ref, psum_ref):
    """Processor node block: split-weight first layer (global term pre-folded into b0),
    fused LN + residual, pad rows zeroed, masked per-tile partial sum for the global pool."""
    x = x_ref[...]
    h = (_dot(x, w0n_ref)
         + _dot(agg_ref[...], w0a_ref)
         + b0_ref[...])
    h = jnp.maximum(h, 0.0)
    h = jnp.maximum(_dot(h, w1_ref, b1_ref), 0.0)
    y = _dot(h, w2_ref, b2_ref)
    out = x.astype(jnp.float32) + _layernorm(y, g_ref, beta_ref)
    out = jnp.where(_row_mask(n_ref, o_ref.shape[0]), out, 0.0)
    o_ref[...] = out.astype(o_ref.dtype)
    psum_ref[...] = jnp.sum(out, axis=0, keepdims=True).reshape(psum_ref.shape)


# ---------------------------------------------------------------------------
# Pallas-call wrappers (inputs already row-padded; outputs stay padded)
# ---------------------------------------------------------------------------
def run_encoder(xp, p, tile, out_dtype=jnp.bfloat16):
    n_pad, fin = xp.shape
    hid = p["w1"].shape[0]
    fout = p["w2"].shape[1]
    return pl.pallas_call(
        _mlp_ln_kernel,
        out_shape=jax.ShapeDtypeStruct((n_pad, fout), out_dtype),
        grid=(n_pad // tile,),
        in_specs=[
            _row_spec(tile, fin),
            _fixed((fin, hid)), _fixed((1, hid)),
            _fixed((hid, hid)), _fixed((1, hid)),
            _fixed((hid, fout)), _fixed((1, fout)),
            _fixed((1, fout)), _fixed((1, fout)),
        ],
        out_specs=_row_spec(tile, fout),
        compiler_params=_PARALLEL,
    )(xp, p["w0"], p["b0"], p["w1"], p["b1"], p["w2"], p["b2"],
      p["ln_g"], p["ln_b"])


def run_decoder(xp, p, w2_pad, b2_pad, tile):
    n_pad, fin = xp.shape
    hid = p["w1"].shape[0]
    fpad = w2_pad.shape[1]
    return pl.pallas_call(
        _mlp_kernel,
        out_shape=jax.ShapeDtypeStruct((n_pad, fpad), jnp.float32),
        grid=(n_pad // tile,),
        in_specs=[
            _row_spec(tile, fin),
            _fixed((fin, hid)), _fixed((1, hid)),
            _fixed((hid, hid)), _fixed((1, hid)),
            _fixed((hid, fpad)), _fixed((1, fpad)),
        ],
        out_specs=_row_spec(tile, fpad),
        compiler_params=_PARALLEL,
    )(xp, p["w0"], p["b0"], p["w1"], p["b1"], w2_pad, b2_pad)


def run_edge_block(edge_lat, node_s, node_r, b0_eff, p, tile, n_real):
    n_pad, L = edge_lat.shape
    hid = p["w1"].shape[0]
    fout = p["w2"].shape[1]
    grid = n_pad // tile
    w0e, w0s, w0r = p["w0_parts"]
    out, psum = pl.pallas_call(
        _edge_block_kernel,
        out_shape=(jax.ShapeDtypeStruct((n_pad, fout), jnp.bfloat16),
                   jax.ShapeDtypeStruct((grid, 1, fout), jnp.float32)),
        grid_spec=pltpu.PrefetchScalarGridSpec(
            num_scalar_prefetch=1,
            grid=(grid,),
            in_specs=[
                _row_spec(tile, L), _row_spec(tile, L), _row_spec(tile, L),
                _fixed((L, hid)), _fixed((L, hid)), _fixed((L, hid)),
                _fixed((1, hid)),
                _fixed((hid, hid)), _fixed((1, hid)),
                _fixed((hid, fout)), _fixed((1, fout)),
                _fixed((1, fout)), _fixed((1, fout)),
            ],
            out_specs=[_row_spec(tile, fout),
                       pl.BlockSpec((1, 1, fout), lambda i, *_: (i, 0, 0))],
        ),
        compiler_params=_PARALLEL,
    )(n_real, edge_lat, node_s, node_r,
      w0e, w0s, w0r, b0_eff,
      p["w1"], p["b1"], p["w2"], p["b2"],
      p["ln_g"], p["ln_b"])
    return out, psum


def run_node_block(node_lat, agg, b0_eff, p, tile, n_real):
    n_pad, L = node_lat.shape
    hid = p["w1"].shape[0]
    fout = p["w2"].shape[1]
    grid = n_pad // tile
    w0n, w0a = p["w0_parts"]
    out, psum = pl.pallas_call(
        _node_block_kernel,
        out_shape=(jax.ShapeDtypeStruct((n_pad, fout), jnp.bfloat16),
                   jax.ShapeDtypeStruct((grid, 1, fout), jnp.float32)),
        grid_spec=pltpu.PrefetchScalarGridSpec(
            num_scalar_prefetch=1,
            grid=(grid,),
            in_specs=[
                _row_spec(tile, L), _row_spec(tile, L),
                _fixed((L, hid)), _fixed((L, hid)),
                _fixed((1, hid)),
                _fixed((hid, hid)), _fixed((1, hid)),
                _fixed((hid, fout)), _fixed((1, fout)),
                _fixed((1, fout)), _fixed((1, fout)),
            ],
            out_specs=[_row_spec(tile, fout),
                       pl.BlockSpec((1, 1, fout), lambda i, *_: (i, 0, 0))],
        ),
        compiler_params=_PARALLEL,
    )(n_real, node_lat, agg,
      w0n, w0a, b0_eff,
      p["w1"], p["b1"], p["w2"], p["b2"],
      p["ln_g"], p["ln_b"])
    return out, psum


# ---------------------------------------------------------------------------
# Plain-JAX MLP for the 1-row global latent (a padded 1-row pallas_call is pure
# launch/DMA overhead).
# ---------------------------------------------------------------------------
def mlp_jax(x, p, use_ln=True):
    h = jax.nn.relu(x @ p["w0"] + p["b0"])
    h = jax.nn.relu(h @ p["w1"] + p["b1"])
    y = h @ p["w2"] + p["b2"]
    if use_ln:
        mu = jnp.mean(y, axis=-1, keepdims=True)
        var = jnp.mean((y - mu) ** 2, axis=-1, keepdims=True)
        y = (y - mu) * jax.lax.rsqrt(var + 1e-5) * p["ln_g"] + p["ln_b"]
    return y


# ---------------------------------------------------------------------------
# Parameter init (deterministic, in-script)
# ---------------------------------------------------------------------------
def _lin(key, a, b):
    return jax.random.normal(key, (a, b), jnp.float32) / jnp.sqrt(jnp.float32(a))


def init_mlp(key, fin, hidden, fout):
    k0, k1, k2 = jax.random.split(key, 3)
    return dict(
        w0=_lin(k0, fin, hidden), b0=jnp.zeros((1, hidden), jnp.float32),
        w1=_lin(k1, hidden, hidden), b1=jnp.zeros((1, hidden), jnp.float32),
        w2=_lin(k2, hidden, fout), b2=jnp.zeros((1, fout), jnp.float32),
        ln_g=jnp.ones((1, fout), jnp.float32), ln_b=jnp.zeros((1, fout), jnp.float32),
    )


def init_normalizer(key, size):
    km, ks = jax.random.split(key)
    mean = 0.1 * jax.random.normal(km, (1, size), jnp.float32)
    std = jnp.abs(jax.random.normal(ks, (1, size), jnp.float32)) + 0.5
    return mean, std


# ---------------------------------------------------------------------------
# Graph construction glue (index manipulation, host side)
# ---------------------------------------------------------------------------
def triangles_to_edges(triangles, rectangles):
    # common.triangles_to_edges(type=3): unique undirected edges, both directions.
    tri = np.asarray(triangles)
    rect = np.asarray(rectangles)
    parts = [tri[:, [0, 1]], tri[:, [1, 2]], tri[:, [2, 0]]]
    if rect.size:
        parts += [rect[:, [0, 1]], rect[:, [1, 2]], rect[:, [2, 3]], rect[:, [3, 0]]]
    edges = np.concatenate(parts, axis=0)
    edges = np.unique(np.sort(edges, axis=1), axis=0)
    senders = np.concatenate([edges[:, 0], edges[:, 1]])
    receivers = np.concatenate([edges[:, 1], edges[:, 0]])
    # Pre-sort by receiver so the downstream segment-sum is segment-contiguous.
    order = np.argsort(receivers, kind="stable")
    senders, receivers = senders[order], receivers[order]
    return jnp.asarray(senders, jnp.int32), jnp.asarray(receivers, jnp.int32)


# ---------------------------------------------------------------------------
# Model
# ---------------------------------------------------------------------------
class PallasCFDModel:
    def __init__(self, output_size=3, latent_size=128, message_passing_steps=3,
                 message_passing_aggregator="sum", key=jax.random.PRNGKey(42)):
        self.output_size = output_size
        self.latent_size = latent_size
        self.message_passing_steps = message_passing_steps
        self.message_passing_aggregator = message_passing_aggregator

        node_feat_dim = output_size + NODE_TYPE_SIZE           # 12
        edge_feat_dim = (output_size - 1) * 2 + 2               # 6
        L = latent_size
        bf16 = jnp.bfloat16

        keys = jax.random.split(key, 8 + 3 * message_passing_steps)
        ki = iter(keys)

        # Normalizers (inference-time fixed statistics).
        # TODO(synk): training-time running-statistics accumulation of Normalizer is stateful; fixed stats used here.
        self.node_mean, node_std = init_normalizer(next(ki), node_feat_dim)
        node_istd = 1.0 / node_std
        self.edge_mean, edge_std = init_normalizer(next(ki), edge_feat_dim)
        edge_istd = 1.0 / edge_std
        self.out_mean, self.out_std = init_normalizer(next(ki), output_size)

        # Encoders: fold input normalization into the first layer (f32 small K).
        def make_encoder(k, fin, mean, istd):
            p = init_mlp(k, fin, L, L)
            w0_eff = p["w0"] * istd.T                  # diag(istd) @ w0
            p["b0"] = p["b0"] - mean @ w0_eff
            p["w0"] = w0_eff                            # keep f32 (K=12/6 unaligned)
            p["w1"] = p["w1"].astype(bf16)
            p["w2"] = p["w2"].astype(bf16)
            return p

        self.node_encoder = make_encoder(next(ki), node_feat_dim, self.node_mean, node_istd)
        self.edge_encoder = make_encoder(next(ki), edge_feat_dim, self.edge_mean, edge_istd)
        self.global_encoder = init_mlp(next(ki), L, L, L)           # plain JAX, 1 row

        # Processor blocks: first-layer weights split (fused concat via split dots);
        # the global slice stays f32 and is applied in JAX (folded into b0 per step).
        def make_edge_block(k):
            p = init_mlp(k, 4 * L, L, L)
            w0 = p.pop("w0")
            p["w0_parts"] = (w0[0:L].astype(bf16), w0[L:2 * L].astype(bf16),
                             w0[2 * L:3 * L].astype(bf16))
            p["w0_glob"] = w0[3 * L:4 * L]
            p["w1"] = p["w1"].astype(bf16)
            p["w2"] = p["w2"].astype(bf16)
            return p

        def make_node_block(k):
            p = init_mlp(k, 3 * L, L, L)
            w0 = p.pop("w0")
            p["w0_parts"] = (w0[0:L].astype(bf16), w0[L:2 * L].astype(bf16))
            p["w0_glob"] = w0[2 * L:3 * L]
            p["w1"] = p["w1"].astype(bf16)
            p["w2"] = p["w2"].astype(bf16)
            return p

        self.edge_blocks = [make_edge_block(next(ki)) for _ in range(message_passing_steps)]
        self.node_blocks = [make_node_block(next(ki)) for _ in range(message_passing_steps)]
        self.global_blocks = [init_mlp(next(ki), 3 * L, L, L) for _ in range(message_passing_steps)]

        # Decoder (no LayerNorm): fold output normalizer inverse into the last layer,
        # pad output lanes to 128 for dense stores.
        dec = init_mlp(next(ki), L, L, output_size)
        w2_eff = dec["w2"] * self.out_std                # (hid,3) * (1,3)
        b2_eff = dec["b2"] * self.out_std + self.out_mean
        dec["w0"] = dec["w0"].astype(bf16)
        dec["w1"] = dec["w1"].astype(bf16)
        self.decoder = dec
        fpad = _round_up(output_size, LANE)
        self.dec_w2_pad = jnp.pad(w2_eff, ((0, 0), (0, fpad - output_size))).astype(bf16)
        self.dec_b2_pad = jnp.pad(b2_eff, ((0, 0), (0, fpad - output_size)))

    # ---- build_graph -------------------------------------------------------
    def build_graph(self, inputs):
        senders, receivers = triangles_to_edges(inputs["triangles"],
                                                inputs["rectangles"])
        one_hot = jax.nn.one_hot(inputs["node_type"][:, 0].astype(jnp.int32),
                                 NODE_TYPE_SIZE, dtype=jnp.float32)
        node_features = jnp.concatenate(
            [inputs["world_pos"] - inputs["prev_world_pos"],
             inputs["velocity"], one_hot], axis=-1)

        wp, mp = inputs["world_pos"], inputs["mesh_pos"]
        rel_w = wp[senders] - wp[receivers]
        rel_m = mp[senders] - mp[receivers]
        edge_features = jnp.concatenate(
            [rel_w, jnp.linalg.norm(rel_w, axis=-1, keepdims=True),
             rel_m, jnp.linalg.norm(rel_m, axis=-1, keepdims=True)], axis=-1)

        global_features = jnp.zeros((1, self.latent_size), jnp.float32)
        return node_features, edge_features, global_features, senders, receivers

    # ---- forward (inference path: is_trainning=False) ----------------------
    def forward(self, inputs, is_trainning=False):
        (node_feat, edge_feat, global_feat,
         senders, receivers) = self.build_graph(inputs)
        n_nodes, n_edges = node_feat.shape[0], edge_feat.shape[0]
        L = self.latent_size

        # Pad once; latents, gathers and scatters stay padded through the whole loop.
        node_tile = _row_tile_for(n_nodes)
        edge_tile = _row_tile_for(n_edges)
        n_node_pad = _round_up(n_nodes, node_tile)
        n_edge_pad = _round_up(n_edges, edge_tile)
        node_feat_p = jnp.pad(node_feat, ((0, n_node_pad - n_nodes), (0, 0)))
        edge_feat_p = jnp.pad(edge_feat, ((0, n_edge_pad - n_edges), (0, 0)))
        e_pad = n_edge_pad - n_edges
        senders_p = jnp.pad(senders, (0, e_pad))                              # gather: any valid node
        recv_gather_p = jnp.pad(receivers, (0, e_pad))
        # Pad-edge messages are zeroed in-kernel, so pointing pad scatters at the last
        # real node keeps the segment ids sorted and cannot pollute real aggregates.
        recv_scatter_p = jnp.pad(receivers, (0, e_pad), constant_values=n_nodes - 1)
        n_nodes_s = jnp.array([n_nodes], jnp.int32)
        n_edges_s = jnp.array([n_edges], jnp.int32)

        # Encoder (input normalization folded into the first-layer weights).
        node_lat = run_encoder(node_feat_p, self.node_encoder, node_tile)      # bf16, padded
        edge_lat = run_encoder(edge_feat_p, self.edge_encoder, edge_tile)      # bf16, padded
        glob_lat = mlp_jax(global_feat, self.global_encoder, use_ln=True)      # 1 row, f32

        # Processor (message passing with global features; residual + LN fused in-kernel;
        # global-latent contribution folded into the first-layer bias per step).
        # TODO(synk): exact EncodeProcessDecodeAlter global-update wiring is not in the prompt; standard sum-pool variant used.
        # TODO(synk): neighbor gather + receiver segment-sum run as XLA ops; a scalar-prefetch
        #             Pallas segment-sum kernel would fuse them with the node block.
        for step in range(self.message_passing_steps):
            eb, nb = self.edge_blocks[step], self.node_blocks[step]
            node_s = jnp.take(node_lat, senders_p, axis=0)
            node_r = jnp.take(node_lat, recv_gather_p, axis=0)

            b0e = eb["b0"] + glob_lat @ eb["w0_glob"]
            edge_lat, edge_psum = run_edge_block(edge_lat, node_s, node_r, b0e,
                                                 eb, edge_tile, n_edges_s)

            # 'sum' aggregator: receiver-sorted segment sum over padded edges.
            agg = jax.ops.segment_sum(edge_lat, recv_scatter_p,
                                      num_segments=n_node_pad,
                                      indices_are_sorted=True)
            b0n = nb["b0"] + glob_lat @ nb["w0_glob"]
            node_lat, node_psum = run_node_block(node_lat, agg, b0n,
                                                 nb, node_tile, n_nodes_s)

            # Global update from the in-kernel masked partial sums (pad rows excluded).
            glob_in = jnp.concatenate(
                [glob_lat, jnp.sum(node_psum, axis=0), jnp.sum(edge_psum, axis=0)],
                axis=-1)
            glob_lat = glob_lat + mlp_jax(glob_in, self.global_blocks[step], use_ln=True)

        # Decoder (no LayerNorm; output normalizer inverse folded in), slice at the very end.
        decoded = run_decoder(node_lat, self.decoder, self.dec_w2_pad,
                              self.dec_b2_pad, node_tile)
        velocity_update = decoded[:n_nodes, :self.output_size]

        if is_trainning:
            # Training path returns the raw (normalized) network output.
            return (velocity_update - self.out_mean) / self.out_std

        # _update: velocity + output_normalizer.inverse(network_output)
        return inputs["velocity"] + velocity_update


# ---------------------------------------------------------------------------
# Demo
# ---------------------------------------------------------------------------
if __name__ == "__main__":
    # Small 3x3 mesh: 9 nodes, 8 triangles, 1 rectangle.
    N = 9
    ys, xs = np.meshgrid(np.arange(3), np.arange(3), indexing="ij")
    mesh_pos_np = np.stack([xs.ravel(), ys.ravel()], axis=-1).astype(np.float32)
    triangles = []
    for r in range(2):
        for c in range(2):
            a = r * 3 + c
            triangles.append([a, a + 1, a + 4])
            triangles.append([a, a + 4, a + 3])
    triangles = np.asarray(triangles, np.int32)
    rectangles = np.asarray([[0, 1, 4, 3]], np.int32)

    key = jax.random.PRNGKey(0)
    k1, k2, k3, k4 = jax.random.split(key, 4)
    mesh_pos = jnp.asarray(mesh_pos_np)
    inputs = {
        "mesh_pos": mesh_pos,
        "world_pos": mesh_pos + 0.01 * jax.random.normal(k1, (N, 2), jnp.float32),
        "prev_world_pos": mesh_pos + 0.01 * jax.random.normal(k2, (N, 2), jnp.float32),
        "velocity": 0.1 * jax.random.normal(k3, (N, 1), jnp.float32),
        "node_type": jax.random.randint(k4, (N, 1), 0, NODE_TYPE_SIZE).astype(jnp.int32),
        "triangles": triangles,
        "rectangles": rectangles,
    }

    model = PallasCFDModel(output_size=3, latent_size=128, message_passing_steps=3,
                           key=jax.random.PRNGKey(42))
    out = model.forward(inputs, is_trainning=False)
    out = jax.block_until_ready(out)
    assert out.shape == (N, 3) and out.dtype == jnp.float32
    assert bool(jnp.all(jnp.isfinite(out)))
    print("KERNEL_OK")
</pallas_src>

<mosaic_0001>
module attributes {stable_mosaic.version = 11 : i64} {
  func.func @_mlp_ln_kernel(%arg0: i32, %arg1: memref<128x12xf32, #tpu.memory_space<vmem>>, %arg2: memref<12x128xf32, #tpu.memory_space<vmem>>, %arg3: memref<1x128xf32, #tpu.memory_space<vmem>>, %arg4: memref<128x128xbf16, #tpu.memory_space<vmem>>, %arg5: memref<1x128xf32, #tpu.memory_space<vmem>>, %arg6: memref<128x128xbf16, #tpu.memory_space<vmem>>, %arg7: memref<1x128xf32, #tpu.memory_space<vmem>>, %arg8: memref<1x128xf32, #tpu.memory_space<vmem>>, %arg9: memref<1x128xf32, #tpu.memory_space<vmem>>, %arg10: memref<128x128xbf16, #tpu.memory_space<vmem>>) attributes {dimension_semantics = [#tpu.dimension_semantics<parallel>], iteration_bounds = array<i64: 1>, scalar_prefetch = 0 : i64, scratch_operands = 0 : i64, tpu.core_type = #tpu.core_type<tc>, window_params = [{transform_indices = @transform_0, window_bounds = array<i64: 128, 12>}, {pipeline_mode = #tpu.pipeline_mode<synchronous>, transform_indices = @transform_1, window_bounds = array<i64: 12, 128>}, {pipeline_mode = #tpu.pipeline_mode<synchronous>, transform_indices = @transform_2, window_bounds = array<i64: 1, 128>}, {pipeline_mode = #tpu.pipeline_mode<synchronous>, transform_indices = @transform_3, window_bounds = array<i64: 128, 128>}, {pipeline_mode = #tpu.pipeline_mode<synchronous>, transform_indices = @transform_4, window_bounds = array<i64: 1, 128>}, {pipeline_mode = #tpu.pipeline_mode<synchronous>, transform_indices = @transform_5, window_bounds = array<i64: 128, 128>}, {pipeline_mode = #tpu.pipeline_mode<synchronous>, transform_indices = @transform_6, window_bounds = array<i64: 1, 128>}, {pipeline_mode = #tpu.pipeline_mode<synchronous>, transform_indices = @transform_7, window_bounds = array<i64: 1, 128>}, {pipeline_mode = #tpu.pipeline_mode<synchronous>, transform_indices = @transform_8, window_bounds = array<i64: 1, 128>}, {transform_indices = @transform_9, window_bounds = array<i64: 128, 128>}]} {
    %c0 = arith.constant 0 : index
    %c0_0 = arith.constant 0 : index
    %0 = vector.load %arg1[%c0, %c0_0] : memref<128x12xf32, #tpu.memory_space<vmem>>, vector<128x12xf32>
    %c0_1 = arith.constant 0 : index
    %c0_2 = arith.constant 0 : index
    %1 = vector.load %arg2[%c0_1, %c0_2] : memref<12x128xf32, #tpu.memory_space<vmem>>, vector<12x128xf32>
    %cst = arith.constant dense<0.000000e+00> : vector<128x128xf32>
    %2 = tpu.matmul %0, %1, %cst {dimension_numbers = #tpu.dot_dimension_numbers<[1], [0], [0], [1], [0, 0, 1, 1], [], []>} : vector<128x12xf32>, vector<12x128xf32>, vector<128x128xf32> -> vector<128x128xf32>
    %c0_3 = arith.constant 0 : index
    %c0_4 = arith.constant 0 : index
    %3 = vector.load %arg3[%c0_3, %c0_4] : memref<1x128xf32, #tpu.memory_space<vmem>>, vector<1x128xf32>
    %4 = vector.broadcast %3 : vector<1x128xf32> to vector<128x128xf32>
    %5 = arith.addf %2, %4 : vector<128x128xf32>
    %cst_5 = arith.constant 0.000000e+00 : f32
    %6 = vector.broadcast %cst_5 : f32 to vector<128x128xf32>
    %7 = arith.maximumf %5, %6 : vector<128x128xf32>
    %8 = arith.truncf %7 : vector<128x128xf32> to vector<128x128xbf16>
    %c0_6 = arith.constant 0 : index
    %c0_7 = arith.constant 0 : index
    %9 = vector.load %arg4[%c0_6, %c0_7] : memref<128x128xbf16, #tpu.memory_space<vmem>>, vector<128x128xbf16>
    %cst_8 = arith.constant dense<0.000000e+00> : vector<128x128xf32>
    %10 = tpu.matmul %8, %9, %cst_8 {dimension_numbers = #tpu.dot_dimension_numbers<[1], [0], [0], [1], [0, 0, 1, 1], [], []>} : vector<128x128xbf16>, vector<128x128xbf16>, vector<128x128xf32> -> vector<128x128xf32>
    %c0_9 = arith.constant 0 : index
    %c0_10 = arith.constant 0 : index
    %11 = vector.load %arg5[%c0_9, %c0_10] : memref<1x128xf32, #tpu.memory_space<vmem>>, vector<1x128xf32>
    %12 = vector.broadcast %11 : vector<1x128xf32> to vector<128x128xf32>
    %13 = arith.addf %10, %12 : vector<128x128xf32>
    %cst_11 = arith.constant 0.000000e+00 : f32
    %14 = vector.broadcast %cst_11 : f32 to vector<128x128xf32>
    %15 = arith.maximumf %13, %14 : vector<128x128xf32>
    %16 = arith.truncf %15 : vector<128x128xf32> to vector<128x128xbf16>
    %c0_12 = arith.constant 0 : index
    %c0_13 = arith.constant 0 : index
    %17 = vector.load %arg6[%c0_12, %c0_13] : memref<128x128xbf16, #tpu.memory_space<vmem>>, vector<128x128xbf16>
    %cst_14 = arith.constant dense<0.000000e+00> : vector<128x128xf32>
    %18 = tpu.matmul %16, %17, %cst_14 {dimension_numbers = #tpu.dot_dimension_numbers<[1], [0], [0], [1], [0, 0, 1, 1], [], []>} : vector<128x128xbf16>, vector<128x128xbf16>, vector<128x128xf32> -> vector<128x128xf32>
    %c0_15 = arith.constant 0 : index
    %c0_16 = arith.constant 0 : index
    %19 = vector.load %arg7[%c0_15, %c0_16] : memref<1x128xf32, #tpu.memory_space<vmem>>, vector<1x128xf32>
    %20 = vector.broadcast %19 : vector<1x128xf32> to vector<128x128xf32>
    %21 = arith.addf %18, %20 : vector<128x128xf32>
    %cst_17 = arith.constant dense<0.000000e+00> : vector<128xf32>
    %22 = vector.multi_reduction <add>, %21, %cst_17 [1] : vector<128x128xf32> to vector<128xf32>
    %23 = vector.shape_cast %22 : vector<128xf32> to vector<128x1xf32>
    %cst_18 = arith.constant 1.280000e+02 : f32
    %24 = vector.broadcast %cst_18 : f32 to vector<128x1xf32>
    %25 = arith.divf %23, %24 : vector<128x1xf32>
    %26 = vector.broadcast %25 : vector<128x1xf32> to vector<128x128xf32>
    %27 = arith.subf %21, %26 : vector<128x128xf32>
    %28 = arith.mulf %27, %27 : vector<128x128xf32>
    %cst_19 = arith.constant dense<0.000000e+00> : vector<128xf32>
    %29 = vector.multi_reduction <add>, %28, %cst_19 [1] : vector<128x128xf32> to vector<128xf32>
    %30 = vector.shape_cast %29 : vector<128xf32> to vector<128x1xf32>
    %cst_20 = arith.constant 1.280000e+02 : f32
    %31 = vector.broadcast %cst_20 : f32 to vector<128x1xf32>
    %32 = arith.divf %30, %31 : vector<128x1xf32>
    %33 = vector.broadcast %25 : vector<128x1xf32> to vector<128x128xf32>
    %34 = arith.subf %21, %33 : vector<128x128xf32>
    %cst_21 = arith.constant 9.99999974E-6 : f32
    %35 = vector.broadcast %cst_21 : f32 to vector<128x1xf32>
    %36 = arith.addf %32, %35 : vector<128x1xf32>
    %37 = math.rsqrt %36 : vector<128x1xf32>
    %38 = vector.broadcast %37 : vector<128x1xf32> to vector<128x128xf32>
    %39 = arith.mulf %34, %38 : vector<128x128xf32>
    %c0_22 = arith.constant 0 : index
    %c0_23 = arith.constant 0 : index
    %40 = vector.load %arg8[%c0_22, %c0_23] : memref<1x128xf32, #tpu.memory_space<vmem>>, vector<1x128xf32>
    %41 = vector.broadcast %40 : vector<1x128xf32> to vector<128x128xf32>
    %42 = arith.mulf %39, %41 : vector<128x128xf32>
    %c0_24 = arith.constant 0 : index
    %c0_25 = arith.constant 0 : index
    %43 = vector.load %arg9[%c0_24, %c0_25] : memref<1x128xf32, #tpu.memory_space<vmem>>, vector<1x128xf32>
    %44 = vector.broadcast %43 : vector<1x128xf32> to vector<128x128xf32>
    %45 = arith.addf %42, %44 : vector<128x128xf32>
    %46 = arith.truncf %45 : vector<128x128xf32> to vector<128x128xbf16>
    %c0_26 = arith.constant 0 : index
    %c0_27 = arith.constant 0 : index
    %47 = vector.load %arg10[%c0_26, %c0_27] : memref<128x128xbf16, #tpu.memory_space<vmem>>, vector<128x128xbf16>
    tpu.vector_store %arg10[%c0_26, %c0_27], %46 {strides = array<i32>} : memref<128x128xbf16, #tpu.memory_space<vmem>>, vector<128x128xbf16>,
    return
  }
  func.func @transform_0(%arg0: i32) -> (i32, i32) {
    %c0_i32 = arith.constant 0 : i32
    %c0_i32_0 = arith.constant 0 : i32
    return %arg0, %c0_i32 : i32, i32
  }
  func.func @transform_1(%arg0: i32) -> (i32, i32) {
    %c0_i32 = arith.constant 0 : i32
    %c0_i32_0 = arith.constant 0 : i32
    %c0_i32_1 = arith.constant 0 : i32
    return %c0_i32, %c0_i32_0 : i32, i32
  }
  func.func @transform_2(%arg0: i32) -> (i32, i32) {
    %c0_i32 = arith.constant 0 : i32
    %c0_i32_0 = arith.constant 0 : i32
    %c0_i32_1 = arith.constant 0 : i32
    return %c0_i32, %c0_i32_0 : i32, i32
  }
  func.func @transform_3(%arg0: i32) -> (i32, i32) {
    %c0_i32 = arith.constant 0 : i32
    %c0_i32_0 = arith.constant 0 : i32
    %c0_i32_1 = arith.constant 0 : i32
    return %c0_i32, %c0_i32_0 : i32, i32
  }
  func.func @transform_4(%arg0: i32) -> (i32, i32) {
    %c0_i32 = arith.constant 0 : i32
    %c0_i32_0 = arith.constant 0 : i32
    %c0_i32_1 = arith.constant 0 : i32
    return %c0_i32, %c0_i32_0 : i32, i32
  }
  func.func @transform_5(%arg0: i32) -> (i32, i32) {
    %c0_i32 = arith.constant 0 : i32
    %c0_i32_0 = arith.constant 0 : i32
    %c0_i32_1 = arith.constant 0 : i32
    return %c0_i32, %c0_i32_0 : i32, i32
  }
  func.func @transform_6(%arg0: i32) -> (i32, i32) {
    %c0_i32 = arith.constant 0 : i32
    %c0_i32_0 = arith.constant 0 : i32
    %c0_i32_1 = arith.constant 0 : i32
    return %c0_i32, %c0_i32_0 : i32, i32
  }
  func.func @transform_7(%arg0: i32) -> (i32, i32) {
    %c0_i32 = arith.constant 0 : i32
    %c0_i32_0 = arith.constant 0 : i32
    %c0_i32_1 = arith.constant 0 : i32
    return %c0_i32, %c0_i32_0 : i32, i32
  }
  func.func @transform_8(%arg0: i32) -> (i32, i32) {
    %c0_i32 = arith.constant 0 : i32
    %c0_i32_0 = arith.constant 0 : i32
    %c0_i32_1 = arith.constant 0 : i32
    return %c0_i32, %c0_i32_0 : i32, i32
  }
  func.func @transform_9(%arg0: i32) -> (i32, i32) {
    %c0_i32 = arith.constant 0 : i32
    %c0_i32_0 = arith.constant 0 : i32
    return %arg0, %c0_i32 : i32, i32
  }
}

</mosaic_0001>

<llo_original>
// kernel: tpu_custom_call.1
$region0: #{tpu_custom_call.1}
  #allocation0 [shape = 'u32[]', space=smem, size = 0x4, offset = 0x4, fixed_abs, tag = 'smem constant byte address 0x4 - core index']
  #allocation1 [shape = 'u32[144,128]{1,0:T(1,128)}', space=vmem, size = 0x12000, scoped, tag = 'internal scratch']
  %s0 = inlined_call_operand.vmem [shape: f32[128,12], index: 0, kind: input, shape index: {}]
  %s1 = inlined_call_operand.vmem [shape: f32[12,128], index: 1, kind: input, shape index: {}]
  %s2 = inlined_call_operand.vmem [shape: f32[1,128], index: 2, kind: input, shape index: {}]
  %s3 = inlined_call_operand.vmem [shape: bf16[128,128], index: 3, kind: input, shape index: {}]
  %s4 = inlined_call_operand.vmem [shape: f32[1,128], index: 4, kind: input, shape index: {}]
  %s5 = inlined_call_operand.vmem [shape: bf16[128,128], index: 5, kind: input, shape index: {}]
  %s6 = inlined_call_operand.vmem [shape: f32[1,128], index: 6, kind: input, shape index: {}]
  %s7 = inlined_call_operand.vmem [shape: f32[1,128], index: 7, kind: input, shape index: {}]
  %s8 = inlined_call_operand.vmem [shape: f32[1,128], index: 8, kind: input, shape index: {}]
  %s9 = inlined_call_operand.hbm [shape: bf16[128,128], index: 9, kind: output, shape index: {}]
  %s10 = sld [smem:[#allocation0]]
  $region46: #{tpu_custom_call.1} parent=0
    _
  %s12 = ssub.s32 1, %s10
  %s13 = scalar_select 0, %s12, %s10
  $region1: #{tpu_custom_call.1} parent=0
    #allocation2 [shape = 'u8[32768]{0}', space=vmem, size = 0x8000, scoped, tag = 'output window, operand 0, single buffered']
    #allocation3 [shape = 's32[1]{0}', space=sflag, size = 0x4, scoped, tag = 'scoped memory for tpu_custom_call.1']
    %14 = vsyncpa [#allocation3], 0
    // Predicated region
    $region2: #{tpu_custom_call.1} parent=1 // pred_check
      _
    $region3: #{tpu_custom_call.1} parent=1 // pred_check_branch
      %16 = sbr.rel (0) target = $region5
    $region4: #{tpu_custom_call.1} parent=1 // pred_region
      _
    $region5: #{tpu_custom_call.1} parent=1 // pred_fallthru
      _
    // Predicated region
    $region6: #{tpu_custom_call.1} parent=1 // pred_check
      _
    $region7: #{tpu_custom_call.1} parent=1 // pred_check_branch
      %18 = sbr.rel (0) target = $region9
    $region8: #{tpu_custom_call.1} parent=1 // pred_region
      _
    $region9: #{tpu_custom_call.1} parent=1 // pred_fallthru
      _
    // Predicated region
    $region10: #{tpu_custom_call.1} parent=1 // pred_check
      _
    $region11: #{tpu_custom_call.1} parent=1 // pred_check_branch
      %20 = sbr.rel (0) target = $region13
    $region12: #{tpu_custom_call.1} parent=1 // pred_region
      _
    $region13: #{tpu_custom_call.1} parent=1 // pred_fallthru
      _
    // Predicated region
    $region14: #{tpu_custom_call.1} parent=1 // pred_check
      _
    $region15: #{tpu_custom_call.1} parent=1 // pred_check_branch
      %22 = sbr.rel (0) target = $region17
    $region16: #{tpu_custom_call.1} parent=1 // pred_region
      _
    $region17: #{tpu_custom_call.1} parent=1 // pred_fallthru
      _
    // Predicated region
    $region18: #{tpu_custom_call.1} parent=1 // pred_check
      _
    $region19: #{tpu_custom_call.1} parent=1 // pred_check_branch
      %24 = sbr.rel (0) target = $region21
    $region20: #{tpu_custom_call.1} parent=1 // pred_region
      _
    $region21: #{tpu_custom_call.1} parent=1 // pred_fallthru
      _
    // Predicated region
    $region22: #{tpu_custom_call.1} parent=1 // pred_check
      _
    $region23: #{tpu_custom_call.1} parent=1 // pred_check_branch
      %26 = sbr.rel (0) target = $region25
    $region24: #{tpu_custom_call.1} parent=1 // pred_region
      _
    $region25: #{tpu_custom_call.1} parent=1 // pred_fallthru
      _
    // Predicated region
    $region26: #{tpu_custom_call.1} parent=1 // pred_check
      _
    $region27: #{tpu_custom_call.1} parent=1 // pred_check_branch
      %28 = sbr.rel (0) target = $region29
    $region28: #{tpu_custom_call.1} parent=1 // pred_region
      _
    $region29: #{tpu_custom_call.1} parent=1 // pred_fallthru
      _
    // Predicated region
    $region30: #{tpu_custom_call.1} parent=1 // pred_check
      _
    $region31: #{tpu_custom_call.1} parent=1 // pred_check_branch
      %30 = sbr.rel (0) target = $region33
    $region32: #{tpu_custom_call.1} parent=1 // pred_region
      _
    $region33: #{tpu_custom_call.1} parent=1 // pred_fallthru
      _
    // Predicated region
    $region34: #{tpu_custom_call.1} parent=1 // pred_check
      _
    $region35: #{tpu_custom_call.1} parent=1 // pred_check_branch
      %32 = sbr.rel (0) target = $region37
    $region36: #{tpu_custom_call.1} parent=1 // pred_region
      _
    $region37: #{tpu_custom_call.1} parent=1 // pred_fallthru
      _
    %v34 = vld [vmem:[%s0] sm:$0xff]
    %v35 = vld [vmem:[%s0 + $0x8] sm:$0xff]
    %v36 = vld [vmem:[%s0 + $0x10] sm:$0xff]
    %v37 = vld [vmem:[%s0 + $0x18] sm:$0xff]
    %v38 = vld [vmem:[%s0 + $0x20] sm:$0xff]
    %v39 = vld [vmem:[%s0 + $0x28] sm:$0xff]
    %v40 = vld [vmem:[%s0 + $0x30] sm:$0xff]
    %v41 = vld [vmem:[%s0 + $0x38] sm:$0xff]
    %v42 = vld [vmem:[%s0 + $0x40] sm:$0xff]
    %v43 = vld [vmem:[%s0 + $0x48] sm:$0xff]
    %v44 = vld [vmem:[%s0 + $0x50] sm:$0xff]
    %v45 = vld [vmem:[%s0 + $0x58] sm:$0xff]
    %v46 = vld [vmem:[%s0 + $0x60] sm:$0xff]
    %v47 = vld [vmem:[%s0 + $0x68] sm:$0xff]
    %v48 = vld [vmem:[%s0 + $0x70] sm:$0xff]
    %v49 = vld [vmem:[%s0 + $0x78] sm:$0xff]
    %v50 = vld [vmem:[%s1] sm:$0xff]
    %v51 = vld [vmem:[%s1 + $0x8] sm:$0xf]
    %v52 = vld [vmem:[%s2] sm:$0x1]
    %v54 = vlaneseq
    %v55 = vshrl.u32 %v54, 7
    %v56 = vsub.s32 0, %v55
    %v57 = vrot.slane %v52, %v56
    %vm59 = vcmask 97280
    %v61 = vsel %vm59, %v34, 0
    %v64 = vsel %vm59, %v35, 0
    %v67 = vsel %vm59, %v36, 0
    %v70 = vsel %vm59, %v37, 0
    %v73 = vsel %vm59, %v38, 0
    %v76 = vsel %vm59, %v39, 0
    %v79 = vsel %vm59, %v40, 0
    %v82 = vsel %vm59, %v41, 0
    %v85 = vsel %vm59, %v42, 0
    %v88 = vsel %vm59, %v43, 0
    %v91 = vsel %vm59, %v44, 0
    %v94 = vsel %vm59, %v45, 0
    %v97 = vsel %vm59, %v46, 0
    %v100 = vsel %vm59, %v47, 0
    %v103 = vsel %vm59, %v48, 0
    %v106 = vsel %vm59, %v49, 0
    %vm108 = vcmask 1043456
    %v110 = vsel %vm108, %v51, 0
    %112 = vmatprep.subr.mxu0 0.0
    %113 = vmatpush1.msra.mxu0 %v50
    %114 = vmatprep.subr.mxu0 0.0
    %115 = vmatpush1.msra.mxu0 %v110
    %116 = vmatprep.subr.mxu0 0.0
    %117 = vmatpush1.msra.mxu0 0.0
    %118 = vmatprep.subr.mxu0 0.0
    %119 = vmatpush1.msra.mxu0 0.0
    %120 = vmatprep.subr.mxu0 0.0
    %121 = vmatpush1.msra.mxu0 0.0
    %122 = vmatprep.subr.mxu0 0.0
    %123 = vmatpush1.msra.mxu0 0.0
    %124 = vmatprep.subr.mxu0 0.0
    %125 = vmatpush1.msra.mxu0 0.0
    %126 = vmatprep.subr.mxu0 0.0
    %127 = vmatpush1.msra.mxu0 0.0
    %128 = vmatprep.subr.mxu0 0.0
    %129 = vmatpush1.msra.mxu0 0.0
    %130 = vmatprep.subr.mxu0 0.0
    %131 = vmatpush1.msra.mxu0 0.0
    %132 = vmatprep.subr.mxu0 0.0
    %133 = vmatpush1.msra.mxu0 0.0
    %134 = vmatprep.subr.mxu0 0.0
    %135 = vmatpush1.msra.mxu0 0.0
    %136 = vmatprep.subr.mxu0 0.0
    %137 = vmatpush1.msra.mxu0 0.0
    %138 = vmatprep.subr.mxu0 0.0
    %139 = vmatpush1.msra.mxu0 0.0
    %140 = vmatprep.subr.mxu0 0.0
    %141 = vmatpush1.msra.mxu0 0.0
    %142 = vmatprep.subr.mxu0 0.0
    %143 = vmatpush1.msra.mxu0 0.0
    %144 = vmatprep.subr.mxu0 0.0
    %145 = vmatpush1.msra.mxu0 0.0
    %146 = vmatprep.subr.mxu0 0.0
    %147 = vmatpush1.msra.mxu0 0.0
    %148 = vmatprep.subr.mxu0 0.0
    %149 = vmatpush1.msra.mxu0 0.0
    %150 = vmatprep.subr.mxu0 0.0
    %151 = vmatpush1.msra.mxu0 0.0
    %152 = vmatprep.subr.mxu0 0.0
    %153 = vmatpush1.msra.mxu0 0.0
    %154 = vmatprep.subr.mxu0 0.0
    %155 = vmatpush1.msra.mxu0 0.0
    %156 = vmatprep.subr.mxu0 0.0
    %157 = vmatpush1.msra.mxu0 0.0
    %158 = vmatprep.subr.mxu0 0.0
    %159 = vmatpush1.msra.mxu0 0.0
    %160 = vmatprep.subr.mxu0 0.0
    %161 = vmatpush1.msra.mxu0 0.0
    %162 = vmatprep.subr.mxu0 0.0
    %163 = vmatpush1.msra.mxu0 0.0
    %164 = vmatprep.subr.mxu0 0.0
    %165 = vmatpush1.msra.mxu0 0.0
    %166 = vmatprep.subr.mxu0 0.0
    %167 = vmatpush1.msra.mxu0 0.0
    %168 = vmatprep.subr.mxu0 0.0
    %169 = vmatpush1.msra.mxu0 0.0
    %170 = vmatprep.subr.mxu0 0.0
    %171 = vmatpush1.msra.mxu0 0.0
    %172 = vmatprep.subr.mxu0 0.0
    %173 = vmatpush1.msra.mxu0 0.0
    %174 = vmatprep.subr.mxu0 0.0
    %175 = vmatpush1.msra.mxu0 0.0
    %176 = vmatprep.mubr.f32.mxu0 0.0
    %177 = vmatmul.mubr.f32.gmra.mrb[0].mxu0 %v61
    %v178 = vpop.f32.mrb[0].mxu0
    %v179 = vadd.f32 %v57, %v178
    %v180 = vpop.f32.mrb[0].mxu0
    %181 = vmatprep.mubr.f32.mxu0 0.0
    %182 = vmatmul.mubr.f32.gmra.mrb[0].mxu0 %v64
    %v183 = vpop.f32.mrb[0].mxu0
    %v184 = vadd.f32 %v57, %v183
    %v185 = vpop.f32.mrb[0].mxu0
    %186 = vmatprep.mubr.f32.mxu0 0.0
    %187 = vmatmul.mubr.f32.gmra.mrb[0].mxu0 %v67
    %v188 = vpop.f32.mrb[0].mxu0
    %v189 = vadd.f32 %v57, %v188
    %v190 = vpop.f32.mrb[0].mxu0
    %191 = vmatprep.mubr.f32.mxu0 0.0
    %192 = vmatmul.mubr.f32.gmra.mrb[0].mxu0 %v70
    %v193 = vpop.f32.mrb[0].mxu0
    %v194 = vadd.f32 %v57, %v193
    %v195 = vpop.f32.mrb[0].mxu0
    %196 = vmatprep.mubr.f32.mxu0 0.0
    %197 = vmatmul.mubr.f32.gmra.mrb[0].mxu0 %v73
    %v198 = vpop.f32.mrb[0].mxu0
    %v199 = vadd.f32 %v57, %v198
    %v200 = vpop.f32.mrb[0].mxu0
    %201 = vmatprep.mubr.f32.mxu0 0.0
    %202 = vmatmul.mubr.f32.gmra.mrb[0].mxu0 %v76
    %v203 = vpop.f32.mrb[0].mxu0
    %v204 = vadd.f32 %v57, %v203
    %v205 = vpop.f32.mrb[0].mxu0
    %206 = vmatprep.mubr.f32.mxu0 0.0
    %207 = vmatmul.mubr.f32.gmra.mrb[0].mxu0 %v79
    %v208 = vpop.f32.mrb[0].mxu0
    %v209 = vadd.f32 %v57, %v208
    %v210 = vpop.f32.mrb[0].mxu0
    %211 = vmatprep.mubr.f32.mxu0 0.0
    %212 = vmatmul.mubr.f32.gmra.mrb[0].mxu0 %v82
    %v213 = vpop.f32.mrb[0].mxu0
    %v214 = vadd.f32 %v57, %v213
    %v215 = vpop.f32.mrb[0].mxu0
    %216 = vmatprep.mubr.f32.mxu0 0.0
    %217 = vmatmul.mubr.f32.gmra.mrb[0].mxu0 %v85
    %v218 = vpop.f32.mrb[0].mxu0
    %v219 = vadd.f32 %v57, %v218
    %v220 = vpop.f32.mrb[0].mxu0
    %221 = vmatprep.mubr.f32.mxu0 0.0
    %222 = vmatmul.mubr.f32.gmra.mrb[0].mxu0 %v88
    %v223 = vpop.f32.mrb[0].mxu0
    %v224 = vadd.f32 %v57, %v223
    %v225 = vpop.f32.mrb[0].mxu0
    %226 = vmatprep.mubr.f32.mxu0 0.0
    %227 = vmatmul.mubr.f32.gmra.mrb[0].mxu0 %v91
    %v228 = vpop.f32.mrb[0].mxu0
    %v229 = vadd.f32 %v57, %v228
    %v230 = vpop.f32.mrb[0].mxu0
    %231 = vmatprep.mubr.f32.mxu0 0.0
    %232 = vmatmul.mubr.f32.gmra.mrb[0].mxu0 %v94
    %v233 = vpop.f32.mrb[0].mxu0
    %v234 = vadd.f32 %v57, %v233
    %v235 = vpop.f32.mrb[0].mxu0
    %236 = vmatprep.mubr.f32.mxu0 0.0
    %237 = vmatmul.mubr.f32.gmra.mrb[0].mxu0 %v97
    %v238 = vpop.f32.mrb[0].mxu0
    %v239 = vadd.f32 %v57, %v238
    %v240 = vpop.f32.mrb[0].mxu0
    %241 = vmatprep.mubr.f32.mxu0 0.0
    %242 = vmatmul.mubr.f32.gmra.mrb[0].mxu0 %v100
    %v243 = vpop.f32.mrb[0].mxu0
    %v244 = vadd.f32 %v57, %v243
    %v245 = vpop.f32.mrb[0].mxu0
    %246 = vmatprep.mubr.f32.mxu0 0.0
    %247 = vmatmul.mubr.f32.gmra.mrb[0].mxu0 %v103
    %v248 = vpop.f32.mrb[0].mxu0
    %v249 = vadd.f32 %v57, %v248
    %v250 = vpop.f32.mrb[0].mxu0
    %251 = vmatprep.mubr.f32.mxu0 0.0
    %252 = vmatmul.mubr.f32.gmra.mrb[0].mxu0 %v106
    %v253 = vpop.f32.mrb[0].mxu0
    %v254 = vadd.f32 %v57, %v253
    %v255 = vpop.f32.mrb[0].mxu0
    %256 = vdwg.mxu0
    %v257 = vmax.f32 %v179, 0.0
    %v258 = vmax.f32 %v184, 0.0
    %v259 = vmax.f32 %v189, 0.0
    %v260 = vmax.f32 %v194, 0.0
    %v261 = vmax.f32 %v199, 0.0
    %v262 = vmax.f32 %v204, 0.0
    %v263 = vmax.f32 %v209, 0.0
    %v264 = vmax.f32 %v214, 0.0
    %v265 = vmax.f32 %v219, 0.0
    %v266 = vmax.f32 %v224, 0.0
    %v267 = vmax.f32 %v229, 0.0
    %v268 = vmax.f32 %v234, 0.0
    %v269 = vmax.f32 %v239, 0.0
    %v270 = vmax.f32 %v244, 0.0
    %v271 = vmax.f32 %v249, 0.0
    %v272 = vmax.f32 %v254, 0.0
    %v273 = vpack.c.bf16 %v258, %v257
    %v274 = vpack.c.bf16 %v260, %v259
    %v275 = vpack.c.bf16 %v262, %v261
    %v276 = vpack.c.bf16 %v264, %v263
    %v277 = vpack.c.bf16 %v266, %v265
    %v278 = vpack.c.bf16 %v268, %v267
    %v279 = vpack.c.bf16 %v270, %v269
    %v280 = vpack.c.bf16 %v272, %v271
    %v281 = vld [vmem:[%s3] sm:$0xf]
    %v282 = vld [vmem:[%s3 + $0x4] sm:$0xf]
    %v283 = vld [vmem:[%s3 + $0x8] sm:$0xf]
    %v284 = vld [vmem:[%s3 + $0xc] sm:$0xf]
    %v285 = vld [vmem:[%s3 + $0x10] sm:$0xf]
    %v286 = vld [vmem:[%s3 + $0x14] sm:$0xf]
    %v287 = vld [vmem:[%s3 + $0x18] sm:$0xf]
    %v288 = vld [vmem:[%s3 + $0x1c] sm:$0xf]
    %v289 = vld [vmem:[%s3 + $0x20] sm:$0xf]
    %v290 = vld [vmem:[%s3 + $0x24] sm:$0xf]
    %v291 = vld [vmem:[%s3 + $0x28] sm:$0xf]
    %v292 = vld [vmem:[%s3 + $0x2c] sm:$0xf]
    %v293 = vld [vmem:[%s3 + $0x30] sm:$0xf]
    %v294 = vld [vmem:[%s3 + $0x34] sm:$0xf]
    %v295 = vld [vmem:[%s3 + $0x38] sm:$0xf]
    %v296 = vld [vmem:[%s3 + $0x3c] sm:$0xf]
    %v297 = vld [vmem:[%s4] sm:$0x1]
    %v299 = vlaneseq
    %v300 = vshrl.u32 %v299, 7
    %v301 = vsub.s32 0, %v300
    %v302 = vrot.slane %v297, %v301
    %v320 = vunpack.c.l.b16 %v281
    %v321 = vunpack.c.l.b16 %v282
    %v322 = vunpack.c.l.b16 %v283
    %v323 = vunpack.c.l.b16 %v284
    %v324 = vunpack.c.l.b16 %v285
    %v325 = vunpack.c.l.b16 %v286
    %v326 = vunpack.c.l.b16 %v287
    %v327 = vunpack.c.l.b16 %v288
    %v328 = vunpack.c.l.b16 %v289
    %v329 = vunpack.c.l.b16 %v290
    %v330 = vunpack.c.l.b16 %v291
    %v331 = vunpack.c.l.b16 %v292
    %v332 = vunpack.c.l.b16 %v293
    %v333 = vunpack.c.l.b16 %v294
    %v334 = vunpack.c.l.b16 %v295
    %v335 = vunpack.c.l.b16 %v296
    %v336 = vpack.c.b16 %v321, %v320
    %v337 = vpack.c.b16 %v323, %v322
    %v338 = vpack.c.b16 %v325, %v324
    %v339 = vpack.c.b16 %v327, %v326
    %v340 = vpack.c.b16 %v329, %v328
    %v341 = vpack.c.b16 %v331, %v330
    %v342 = vpack.c.b16 %v333, %v332
    %v343 = vpack.c.b16 %v335, %v334
    %352 = vmatprep.subr.bf16.mxu0 0
    %353 = vmatpush1.bf16.msra.mxu0 %v336
    %354 = vmatprep.subr.bf16.mxu0 0
    %355 = vmatpush1.bf16.msra.mxu0 %v337
    %356 = vmatprep.subr.bf16.mxu0 0
    %357 = vmatpush1.bf16.msra.mxu0 %v338
    %358 = vmatprep.subr.bf16.mxu0 0
    %359 = vmatpush1.bf16.msra.mxu0 %v339
    %360 = vmatprep.subr.bf16.mxu0 0
    %361 = vmatpush1.bf16.msra.mxu0 %v340
    %362 = vmatprep.subr.bf16.mxu0 0
    %363 = vmatpush1.bf16.msra.mxu0 %v341
    %364 = vmatprep.subr.bf16.mxu0 0
    %365 = vmatpush1.bf16.msra.mxu0 %v342
    %366 = vmatprep.subr.bf16.mxu0 0
    %367 = vmatpush1.bf16.msra.mxu0 %v343
    %368 = vmatprep.subr.bf16.mxu0 0
    %369 = vmatpush1.bf16.msra.mxu0 0
    %370 = vmatprep.subr.bf16.mxu0 0
    %371 = vmatpush1.bf16.msra.mxu0 0
    %372 = vmatprep.subr.bf16.mxu0 0
    %373 = vmatpush1.bf16.msra.mxu0 0
    %374 = vmatprep.subr.bf16.mxu0 0
    %375 = vmatpush1.bf16.msra.mxu0 0
    %376 = vmatprep.subr.bf16.mxu0 0
    %377 = vmatpush1.bf16.msra.mxu0 0
    %378 = vmatprep.subr.bf16.mxu0 0
    %379 = vmatpush1.bf16.msra.mxu0 0
    %380 = vmatprep.subr.bf16.mxu0 0
    %381 = vmatpush1.bf16.msra.mxu0 0
    %382 = vmatprep.subr.bf16.mxu0 0
    %383 = vmatpush1.bf16.msra.mxu0 0
    %384 = vmatprep.mubr.bf16.mxu0 0
    %385 = vmatmul.mubr.bf16.gmra.mrb[0].mxu0 %v273
    %v386 = vpop.f32.mrb[0].mxu0
    %v387 = vadd.f32 %v302, %v386
    %v388 = vpop.f32.mrb[0].mxu0
    %v389 = vpop.f32.mrb[0].mxu0
    %v390 = vadd.f32 %v302, %v389
    %v391 = vpop.f32.mrb[0].mxu0
    %392 = vmatprep.mubr.bf16.mxu0 0
    %393 = vmatmul.mubr.bf16.gmra.mrb[0].mxu0 %v274
    %v394 = vpop.f32.mrb[0].mxu0
    %v395 = vadd.f32 %v302, %v394
    %v396 = vpop.f32.mrb[0].mxu0
    %v397 = vpop.f32.mrb[0].mxu0
    %v398 = vadd.f32 %v302, %v397
    %v399 = vpop.f32.mrb[0].mxu0
    %400 = vmatprep.mubr.bf16.mxu0 0
    %401 = vmatmul.mubr.bf16.gmra.mrb[0].mxu0 %v275
    %v402 = vpop.f32.mrb[0].mxu0
    %v403 = vadd.f32 %v302, %v402
    %v404 = vpop.f32.mrb[0].mxu0
    %v405 = vpop.f32.mrb[0].mxu0
    %v406 = vadd.f32 %v302, %v405
    %v407 = vpop.f32.mrb[0].mxu0
    %408 = vmatprep.mubr.bf16.mxu0 0
    %409 = vmatmul.mubr.bf16.gmra.mrb[0].mxu0 %v276
    %v410 = vpop.f32.mrb[0].mxu0
    %v411 = vadd.f32 %v302, %v410
    %v412 = vpop.f32.mrb[0].mxu0
    %v413 = vpop.f32.mrb[0].mxu0
    %v414 = vadd.f32 %v302, %v413
    %v415 = vpop.f32.mrb[0].mxu0
    %416 = vmatprep.mubr.bf16.mxu0 0
    %417 = vmatmul.mubr.bf16.gmra.mrb[0].mxu0 %v277
    %v418 = vpop.f32.mrb[0].mxu0
    %v419 = vadd.f32 %v302, %v418
    %v420 = vpop.f32.mrb[0].mxu0
    %v421 = vpop.f32.mrb[0].mxu0
    %v422 = vadd.f32 %v302, %v421
    %v423 = vpop.f32.mrb[0].mxu0
    %424 = vmatprep.mubr.bf16.mxu0 0
    %425 = vmatmul.mubr.bf16.gmra.mrb[0].mxu0 %v278
    %v426 = vpop.f32.mrb[0].mxu0
    %v427 = vadd.f32 %v302, %v426
    %v428 = vpop.f32.mrb[0].mxu0
    %v429 = vpop.f32.mrb[0].mxu0
    %v430 = vadd.f32 %v302, %v429
    %v431 = vpop.f32.mrb[0].mxu0
    %432 = vmatprep.mubr.bf16.mxu0 0
    %433 = vmatmul.mubr.bf16.gmra.mrb[0].mxu0 %v279
    %v434 = vpop.f32.mrb[0].mxu0
    %v435 = vadd.f32 %v302, %v434
    %v436 = vpop.f32.mrb[0].mxu0
    %v437 = vpop.f32.mrb[0].mxu0
    %v438 = vadd.f32 %v302, %v437
    %v439 = vpop.f32.mrb[0].mxu0
    %440 = vmatprep.mubr.bf16.mxu0 0
    %441 = vmatmul.mubr.bf16.gmra.mrb[0].mxu0 %v280
    %v442 = vpop.f32.mrb[0].mxu0
    %v443 = vadd.f32 %v302, %v442
    %v444 = vpop.f32.mrb[0].mxu0
    %v445 = vpop.f32.mrb[0].mxu0
    %v446 = vadd.f32 %v302, %v445
    %v447 = vpop.f32.mrb[0].mxu0
    %448 = vdwg.mxu0
    %v449 = vmax.f32 %v387, 0.0
    %v450 = vmax.f32 %v390, 0.0
    %v451 = vmax.f32 %v395, 0.0
    %v452 = vmax.f32 %v398, 0.0
    %v453 = vmax.f32 %v403, 0.0
    %v454 = vmax.f32 %v406, 0.0
    %v455 = vmax.f32 %v411, 0.0
    %v456 = vmax.f32 %v414, 0.0
    %v457 = vmax.f32 %v419, 0.0
    %v458 = vmax.f32 %v422, 0.0
    %v459 = vmax.f32 %v427, 0.0
    %v460 = vmax.f32 %v430, 0.0
    %v461 = vmax.f32 %v435, 0.0
    %v462 = vmax.f32 %v438, 0.0
    %v463 = vmax.f32 %v443, 0.0
    %v464 = vmax.f32 %v446, 0.0
    %v465 = vpack.c.bf16 %v450, %v449
    %v466 = vpack.c.bf16 %v452, %v451
    %v467 = vpack.c.bf16 %v454, %v453
    %v468 = vpack.c.bf16 %v456, %v455
    %v469 = vpack.c.bf16 %v458, %v457
    %v470 = vpack.c.bf16 %v460, %v459
    %v471 = vpack.c.bf16 %v462, %v461
    %v472 = vpack.c.bf16 %v464, %v463
    %v473 = vld [vmem:[%s5] sm:$0xf]
    %v474 = vld [vmem:[%s5 + $0x4] sm:$0xf]
    %v475 = vld [vmem:[%s5 + $0x8] sm:$0xf]
    %v476 = vld [vmem:[%s5 + $0xc] sm:$0xf]
    %v477 = vld [vmem:[%s5 + $0x10] sm:$0xf]
    %v478 = vld [vmem:[%s5 + $0x14] sm:$0xf]
    %v479 = vld [vmem:[%s5 + $0x18] sm:$0xf]
    %v480 = vld [vmem:[%s5 + $0x1c] sm:$0xf]
    %v481 = vld [vmem:[%s5 + $0x20] sm:$0xf]
    %v482 = vld [vmem:[%s5 + $0x24] sm:$0xf]
    %v483 = vld [vmem:[%s5 + $0x28] sm:$0xf]
    %v484 = vld [vmem:[%s5 + $0x2c] sm:$0xf]
    %v485 = vld [vmem:[%s5 + $0x30] sm:$0xf]
    %v486 = vld [vmem:[%s5 + $0x34] sm:$0xf]
    %v487 = vld [vmem:[%s5 + $0x38] sm:$0xf]
    %v488 = vld [vmem:[%s5 + $0x3c] sm:$0xf]
    %v489 = vld [vmem:[%s6] sm:$0x1]
    %v491 = vlaneseq
    %v492 = vshrl.u32 %v491, 7
    %v493 = vsub.s32 0, %v492
    %v494 = vrot.slane %v489, %v493
    %v512 = vunpack.c.l.b16 %v473
    %v513 = vunpack.c.l.b16 %v474
    %v514 = vunpack.c.l.b16 %v475
    %v515 = vunpack.c.l.b16 %v476
    %v516 = vunpack.c.l.b16 %v477
    %v517 = vunpack.c.l.b16 %v478
    %v518 = vunpack.c.l.b16 %v479
    %v519 = vunpack.c.l.b16 %v480
    %v520 = vunpack.c.l.b16 %v481
    %v521 = vunpack.c.l.b16 %v482
    %v522 = vunpack.c.l.b16 %v483
    %v523 = vunpack.c.l.b16 %v484
    %v524 = vunpack.c.l.b16 %v485
    %v525 = vunpack.c.l.b16 %v486
    %v526 = vunpack.c.l.b16 %v487
    %v527 = vunpack.c.l.b16 %v488
    %v528 = vpack.c.b16 %v513, %v512
    %v529 = vpack.c.b16 %v515, %v514
    %v530 = vpack.c.b16 %v517, %v516
    %v531 = vpack.c.b16 %v519, %v518
    %v532 = vpack.c.b16 %v521, %v520
    %v533 = vpack.c.b16 %v523, %v522
    %v534 = vpack.c.b16 %v525, %v524
    %v535 = vpack.c.b16 %v527, %v526
    %544 = vmatprep.subr.bf16.mxu0 0
    %545 = vmatpush1.bf16.msra.mxu0 %v528
    %546 = vmatprep.subr.bf16.mxu0 0
    %547 = vmatpush1.bf16.msra.mxu0 %v529
    %548 = vmatprep.subr.bf16.mxu0 0
    %549 = vmatpush1.bf16.msra.mxu0 %v530
    %550 = vmatprep.subr.bf16.mxu0 0
    %551 = vmatpush1.bf16.msra.mxu0 %v531
    %552 = vmatprep.subr.bf16.mxu0 0
    %553 = vmatpush1.bf16.msra.mxu0 %v532
    %554 = vmatprep.subr.bf16.mxu0 0
    %555 = vmatpush1.bf16.msra.mxu0 %v533
    %556 = vmatprep.subr.bf16.mxu0 0
    %557 = vmatpush1.bf16.msra.mxu0 %v534
    %558 = vmatprep.subr.bf16.mxu0 0
    %559 = vmatpush1.bf16.msra.mxu0 %v535
    %560 = vmatprep.subr.bf16.mxu0 0
    %561 = vmatpush1.bf16.msra.mxu0 0
    %562 = vmatprep.subr.bf16.mxu0 0
    %563 = vmatpush1.bf16.msra.mxu0 0
    %564 = vmatprep.subr.bf16.mxu0 0
    %565 = vmatpush1.bf16.msra.mxu0 0
    %566 = vmatprep.subr.bf16.mxu0 0
    %567 = vmatpush1.bf16.msra.mxu0 0
    %568 = vmatprep.subr.bf16.mxu0 0
    %569 = vmatpush1.bf16.msra.mxu0 0
    %570 = vmatprep.subr.bf16.mxu0 0
    %571 = vmatpush1.bf16.msra.mxu0 0
    %572 = vmatprep.subr.bf16.mxu0 0
    %573 = vmatpush1.bf16.msra.mxu0 0
    %574 = vmatprep.subr.bf16.mxu0 0
    %575 = vmatpush1.bf16.msra.mxu0 0
    %576 = vmatprep.mubr.bf16.mxu0 0
    %577 = vmatmul.mubr.bf16.gmra.mrb[0].mxu0 %v465
    %v578 = vpop.f32.mrb[0].mxu0
    %v579 = vadd.f32 %v494, %v578
    %v580 = vpop.f32.mrb[0].mxu0
    %v581 = vpop.f32.mrb[0].mxu0
    %v582 = vadd.f32 %v494, %v581
    %v583 = vpop.f32.mrb[0].mxu0
    %584 = vmatprep.mubr.bf16.mxu0 0
    %585 = vmatmul.mubr.bf16.gmra.mrb[0].mxu0 %v466
    %v586 = vpop.f32.mrb[0].mxu0
    %v587 = vadd.f32 %v494, %v586
    %v588 = vpop.f32.mrb[0].mxu0
    %v589 = vpop.f32.mrb[0].mxu0
    %v590 = vadd.f32 %v494, %v589
    %v591 = vpop.f32.mrb[0].mxu0
    %592 = vmatprep.mubr.bf16.mxu0 0
    %593 = vmatmul.mubr.bf16.gmra.mrb[0].mxu0 %v467
    %v594 = vpop.f32.mrb[0].mxu0
    %v595 = vadd.f32 %v494, %v594
    %v596 = vpop.f32.mrb[0].mxu0
    %v597 = vpop.f32.mrb[0].mxu0
    %v598 = vadd.f32 %v494, %v597
    %v599 = vpop.f32.mrb[0].mxu0
    %600 = vmatprep.mubr.bf16.mxu0 0
    %601 = vmatmul.mubr.bf16.gmra.mrb[0].mxu0 %v468
    %v602 = vpop.f32.mrb[0].mxu0
    %v603 = vadd.f32 %v494, %v602
    %v604 = vpop.f32.mrb[0].mxu0
    %v605 = vpop.f32.mrb[0].mxu0
    %v606 = vadd.f32 %v494, %v605
    %v607 = vpop.f32.mrb[0].mxu0
    %608 = vmatprep.mubr.bf16.mxu0 0
    %609 = vmatmul.mubr.bf16.gmra.mrb[0].mxu0 %v469
    %v610 = vpop.f32.mrb[0].mxu0
    %v611 = vadd.f32 %v494, %v610
    %v612 = vpop.f32.mrb[0].mxu0
    %v613 = vpop.f32.mrb[0].mxu0
    %v614 = vadd.f32 %v494, %v613
    %v615 = vpop.f32.mrb[0].mxu0
    %616 = vmatprep.mubr.bf16.mxu0 0
    %617 = vmatmul.mubr.bf16.gmra.mrb[0].mxu0 %v470
    %v618 = vpop.f32.mrb[0].mxu0
    %v619 = vadd.f32 %v494, %v618
    %v620 = vpop.f32.mrb[0].mxu0
    %v621 = vpop.f32.mrb[0].mxu0
    %v622 = vadd.f32 %v494, %v621
    %v623 = vpop.f32.mrb[0].mxu0
    %624 = vmatprep.mubr.bf16.mxu0 0
    %625 = vmatmul.mubr.bf16.gmra.mrb[0].mxu0 %v471
    %v626 = vpop.f32.mrb[0].mxu0
    %v627 = vadd.f32 %v494, %v626
    %v628 = vpop.f32.mrb[0].mxu0
    %v629 = vpop.f32.mrb[0].mxu0
    %v630 = vadd.f32 %v494, %v629
    %v631 = vpop.f32.mrb[0].mxu0
    %632 = vmatprep.mubr.bf16.mxu0 0
    %633 = vmatmul.mubr.bf16.gmra.mrb[0].mxu0 %v472
    %v634 = vpop.f32.mrb[0].mxu0
    %v635 = vadd.f32 %v494, %v634
    %v636 = vpop.f32.mrb[0].mxu0
    %v637 = vpop.f32.mrb[0].mxu0
    %v638 = vadd.f32 %v494, %v637
    %v639 = vpop.f32.mrb[0].mxu0
    %640 = vdwg.mxu0
    %641 = vadd.xlane.f32.xlu0 %v579
    %v642 = vpop.xlane.xlu0 %641
    %643 = vadd.xlane.f32.xlu0 %v582
    %v644 = vpop.xlane.xlu0 %643
    %645 = vadd.xlane.f32.xlu0 %v587
    %v646 = vpop.xlane.xlu0 %645
    %647 = vadd.xlane.f32.xlu0 %v590
    %v648 = vpop.xlane.xlu0 %647
    %649 = vadd.xlane.f32.xlu0 %v595
    %v650 = vpop.xlane.xlu0 %649
    %651 = vadd.xlane.f32.xlu0 %v598
    %v652 = vpop.xlane.xlu0 %651
    %653 = vadd.xlane.f32.xlu0 %v603
    %v654 = vpop.xlane.xlu0 %653
    %655 = vadd.xlane.f32.xlu0 %v606
    %v656 = vpop.xlane.xlu0 %655
    %657 = vadd.xlane.f32.xlu0 %v611
    %v658 = vpop.xlane.xlu0 %657
    %659 = vadd.xlane.f32.xlu0 %v614
    %v660 = vpop.xlane.xlu0 %659
    %661 = vadd.xlane.f32.xlu0 %v619
    %v662 = vpop.xlane.xlu0 %661
    %663 = vadd.xlane.f32.xlu0 %v622
    %v664 = vpop.xlane.xlu0 %663
    %665 = vadd.xlane.f32.xlu0 %v627
    %v666 = vpop.xlane.xlu0 %665
    %667 = vadd.xlane.f32.xlu0 %v630
    %v668 = vpop.xlane.xlu0 %667
    %669 = vadd.xlane.f32.xlu0 %v635
    %v670 = vpop.xlane.xlu0 %669
    %671 = vadd.xlane.f32.xlu0 %v638
    %v672 = vpop.xlane.xlu0 %671
    %v673 = vrcp.pop 128.0
    %v674 = vmul.f32 %v642, %v673
    %v675 = vmul.f32 %v644, %v673
    %v676 = vmul.f32 %v646, %v673
    %v677 = vmul.f32 %v648, %v673
    %v678 = vmul.f32 %v650, %v673
    %v679 = vmul.f32 %v652, %v673
    %v680 = vmul.f32 %v654, %v673
    %v681 = vmul.f32 %v656, %v673
    %v682 = vmul.f32 %v658, %v673
    %v683 = vmul.f32 %v660, %v673
    %v684 = vmul.f32 %v662, %v673
    %v685 = vmul.f32 %v664, %v673
    %v686 = vmul.f32 %v666, %v673
    %v687 = vmul.f32 %v668, %v673
    %v688 = vmul.f32 %v670, %v673
    %v689 = vmul.f32 %v672, %v673
    %v690 = vsub.f32 %v579, %v674
    %v691 = vsub.f32 %v582, %v675
    %v692 = vsub.f32 %v587, %v676
    %v693 = vsub.f32 %v590, %v677
    %v694 = vsub.f32 %v595, %v678
    %v695 = vsub.f32 %v598, %v679
    %v696 = vsub.f32 %v603, %v680
    %v697 = vsub.f32 %v606, %v681
    %v698 = vsub.f32 %v611, %v682
    %v699 = vsub.f32 %v614, %v683
    %v700 = vsub.f32 %v619, %v684
    %v701 = vsub.f32 %v622, %v685
    %v702 = vsub.f32 %v627, %v686
    %v703 = vsub.f32 %v630, %v687
    %v704 = vsub.f32 %v635, %v688
    %v705 = vsub.f32 %v638, %v689
    %v706 = vmul.f32 %v690, %v690
    %v707 = vmul.f32 %v691, %v691
    %v708 = vmul.f32 %v692, %v692
    %v709 = vmul.f32 %v693, %v693
    %v710 = vmul.f32 %v694, %v694
    %v711 = vmul.f32 %v695, %v695
    %v712 = vmul.f32 %v696, %v696
    %v713 = vmul.f32 %v697, %v697
    %v714 = vmul.f32 %v698, %v698
    %v715 = vmul.f32 %v699, %v699
    %v716 = vmul.f32 %v700, %v700
    %v717 = vmul.f32 %v701, %v701
    %v718 = vmul.f32 %v702, %v702
    %v719 = vmul.f32 %v703, %v703
    %v720 = vmul.f32 %v704, %v704
    %v721 = vmul.f32 %v705, %v705
    %722 = vadd.xlane.f32.xlu0 %v706
    %v723 = vpop.xlane.xlu0 %722
    %724 = vadd.xlane.f32.xlu0 %v707
    %v725 = vpop.xlane.xlu0 %724
    %726 = vadd.xlane.f32.xlu0 %v708
    %v727 = vpop.xlane.xlu0 %726
    %728 = vadd.xlane.f32.xlu0 %v709
    %v729 = vpop.xlane.xlu0 %728
    %730 = vadd.xlane.f32.xlu0 %v710
    %v731 = vpop.xlane.xlu0 %730
    %732 = vadd.xlane.f32.xlu0 %v711
    %v733 = vpop.xlane.xlu0 %732
    %734 = vadd.xlane.f32.xlu0 %v712
    %v735 = vpop.xlane.xlu0 %734
    %736 = vadd.xlane.f32.xlu0 %v713
    %v737 = vpop.xlane.xlu0 %736
    %738 = vadd.xlane.f32.xlu0 %v714
    %v739 = vpop.xlane.xlu0 %738
    %740 = vadd.xlane.f32.xlu0 %v715
    %v741 = vpop.xlane.xlu0 %740
    %742 = vadd.xlane.f32.xlu0 %v716
    %v743 = vpop.xlane.xlu0 %742
    %744 = vadd.xlane.f32.xlu0 %v717
    %v745 = vpop.xlane.xlu0 %744
    %746 = vadd.xlane.f32.xlu0 %v718
    %v747 = vpop.xlane.xlu0 %746
    %748 = vadd.xlane.f32.xlu0 %v719
    %v749 = vpop.xlane.xlu0 %748
    %750 = vadd.xlane.f32.xlu0 %v720
    %v751 = vpop.xlane.xlu0 %750
    %752 = vadd.xlane.f32.xlu0 %v721
    %v753 = vpop.xlane.xlu0 %752
    %v754 = vmul.f32 %v723, %v673
    %v755 = vmul.f32 %v725, %v673
    %v756 = vmul.f32 %v727, %v673
    %v757 = vmul.f32 %v729, %v673
    %v758 = vmul.f32 %v731, %v673
    %v759 = vmul.f32 %v733, %v673
    %v760 = vmul.f32 %v735, %v673
    %v761 = vmul.f32 %v737, %v673
    %v762 = vmul.f32 %v739, %v673
    %v763 = vmul.f32 %v741, %v673
    %v764 = vmul.f32 %v743, %v673
    %v765 = vmul.f32 %v745, %v673
    %v766 = vmul.f32 %v747, %v673
    %v767 = vmul.f32 %v749, %v673
    %v768 = vmul.f32 %v751, %v673
    %v769 = vmul.f32 %v753, %v673
    %v770 = vadd.f32 %v754, 1e-05
    %v771 = vadd.f32 %v755, 1e-05
    %v772 = vadd.f32 %v756, 1e-05
    %v773 = vadd.f32 %v757, 1e-05
    %v774 = vadd.f32 %v758, 1e-05
    %v775 = vadd.f32 %v759, 1e-05
    %v776 = vadd.f32 %v760, 1e-05
    %v777 = vadd.f32 %v761, 1e-05
    %v778 = vadd.f32 %v762, 1e-05
    %v779 = vadd.f32 %v763, 1e-05
    %v780 = vadd.f32 %v764, 1e-05
    %v781 = vadd.f32 %v765, 1e-05
    %v782 = vadd.f32 %v766, 1e-05
    %v783 = vadd.f32 %v767, 1e-05
    %v784 = vadd.f32 %v768, 1e-05
    %v785 = vadd.f32 %v769, 1e-05
    %v786 = vrsqrt.pop %v770
    %v787 = vrsqrt.pop %v771
    %v788 = vrsqrt.pop %v772
    %v789 = vrsqrt.pop %v773
    %v790 = vrsqrt.pop %v774
    %v791 = vrsqrt.pop %v775
    %v792 = vrsqrt.pop %v776
    %v793 = vrsqrt.pop %v777
    %v794 = vrsqrt.pop %v778
    %v795 = vrsqrt.pop %v779
    %v796 = vrsqrt.pop %v780
    %v797 = vrsqrt.pop %v781
    %v798 = vrsqrt.pop %v782
    %v799 = vrsqrt.pop %v783
    %v800 = vrsqrt.pop %v784
    %v801 = vrsqrt.pop %v785
    %v802 = vmul.f32 %v690, %v786
    %v803 = vmul.f32 %v691, %v787
    %v804 = vmul.f32 %v692, %v788
    %v805 = vmul.f32 %v693, %v789
    %v806 = vmul.f32 %v694, %v790
    %v807 = vmul.f32 %v695, %v791
    %v808 = vmul.f32 %v696, %v792
    %v809 = vmul.f32 %v697, %v793
    %v810 = vmul.f32 %v698, %v794
    %v811 = vmul.f32 %v699, %v795
    %v812 = vmul.f32 %v700, %v796
    %v813 = vmul.f32 %v701, %v797
    %v814 = vmul.f32 %v702, %v798
    %v815 = vmul.f32 %v703, %v799
    %v816 = vmul.f32 %v704, %v800
    %v817 = vmul.f32 %v705, %v801
    %v818 = vld [vmem:[%s7] sm:$0x1]
    %v820 = vlaneseq
    %v821 = vshrl.u32 %v820, 7
    %v822 = vsub.s32 0, %v821
    %v823 = vrot.slane %v818, %v822
    %v825 = vmul.f32 %v802, %v823
    %v826 = vmul.f32 %v803, %v823
    %v827 = vmul.f32 %v804, %v823
    %v828 = vmul.f32 %v805, %v823
    %v829 = vmul.f32 %v806, %v823
    %v830 = vmul.f32 %v807, %v823
    %v831 = vmul.f32 %v808, %v823
    %v832 = vmul.f32 %v809, %v823
    %v833 = vmul.f32 %v810, %v823
    %v834 = vmul.f32 %v811, %v823
    %v835 = vmul.f32 %v812, %v823
    %v836 = vmul.f32 %v813, %v823
    %v837 = vmul.f32 %v814, %v823
    %v838 = vmul.f32 %v815, %v823
    %v839 = vmul.f32 %v816, %v823
    %v840 = vmul.f32 %v817, %v823
    %v841 = vld [vmem:[%s8] sm:$0x1]
    %v843 = vlaneseq
    %v844 = vshrl.u32 %v843, 7
    %v845 = vsub.s32 0, %v844
    %v846 = vrot.slane %v841, %v845
    %v848 = vadd.f32 %v825, %v846
    %v849 = vadd.f32 %v826, %v846
    %v850 = vadd.f32 %v827, %v846
    %v851 = vadd.f32 %v828, %v846
    %v852 = vadd.f32 %v829, %v846
    %v853 = vadd.f32 %v830, %v846
    %v854 = vadd.f32 %v831, %v846
    %v855 = vadd.f32 %v832, %v846
    %v856 = vadd.f32 %v833, %v846
    %v857 = vadd.f32 %v834, %v846
    %v858 = vadd.f32 %v835, %v846
    %v859 = vadd.f32 %v836, %v846
    %v860 = vadd.f32 %v837, %v846
    %v861 = vadd.f32 %v838, %v846
    %v862 = vadd.f32 %v839, %v846
    %v863 = vadd.f32 %v840, %v846
    %v864 = vpack.c.bf16 %v849, %v848
    %v865 = vpack.c.bf16 %v851, %v850
    %v866 = vpack.c.bf16 %v853, %v852
    %v867 = vpack.c.bf16 %v855, %v854
    %v868 = vpack.c.bf16 %v857, %v856
    %v869 = vpack.c.bf16 %v859, %v858
    %v870 = vpack.c.bf16 %v861, %v860
    %v871 = vpack.c.bf16 %v863, %v862
    %v880 = vunpack.c.l.b16 %v864
    %v881 = vunpack.c.h.b16 %v864
    %v882 = vunpack.c.l.b16 %v865
    %v883 = vunpack.c.h.b16 %v865
    %v884 = vunpack.c.l.b16 %v866
    %v885 = vunpack.c.h.b16 %v866
    %v886 = vunpack.c.l.b16 %v867
    %v887 = vunpack.c.h.b16 %v867
    %v888 = vunpack.c.l.b16 %v868
    %v889 = vunpack.c.h.b16 %v868
    %v890 = vunpack.c.l.b16 %v869
    %v891 = vunpack.c.h.b16 %v869
    %v892 = vunpack.c.l.b16 %v870
    %v893 = vunpack.c.h.b16 %v870
    %v894 = vunpack.c.l.b16 %v871
    %v895 = vunpack.c.h.b16 %v871
    %v896 = vpack.c.b16 %v880, %v880
    %v897 = vpack.c.b16 %v881, %v881
    %v898 = vpack.c.b16 %v882, %v882
    %v899 = vpack.c.b16 %v883, %v883
    %v900 = vpack.c.b16 %v884, %v884
    %v901 = vpack.c.b16 %v885, %v885
    %v902 = vpack.c.b16 %v886, %v886
    %v903 = vpack.c.b16 %v887, %v887
    %v904 = vpack.c.b16 %v888, %v888
    %v905 = vpack.c.b16 %v889, %v889
    %v906 = vpack.c.b16 %v890, %v890
    %v907 = vpack.c.b16 %v891, %v891
    %v908 = vpack.c.b16 %v892, %v892
    %v909 = vpack.c.b16 %v893, %v893
    %v910 = vpack.c.b16 %v894, %v894
    %v911 = vpack.c.b16 %v895, %v895
    %928 = vst [vmem:[#allocation2] sm:$0xf] %v896
    %929 = vst [vmem:[#allocation2 + $0x4] sm:$0xf] %v897
    %930 = vst [vmem:[#allocation2 + $0x8] sm:$0xf] %v898
    %931 = vst [vmem:[#allocation2 + $0xc] sm:$0xf] %v899
    %932 = vst [vmem:[#allocation2 + $0x10] sm:$0xf] %v900
    %933 = vst [vmem:[#allocation2 + $0x14] sm:$0xf] %v901
    %934 = vst [vmem:[#allocation2 + $0x18] sm:$0xf] %v902
    %935 = vst [vmem:[#allocation2 + $0x1c] sm:$0xf] %v903
    %936 = vst [vmem:[#allocation2 + $0x20] sm:$0xf] %v904
    %937 = vst [vmem:[#allocation2 + $0x24] sm:$0xf] %v905
    %938 = vst [vmem:[#allocation2 + $0x28] sm:$0xf] %v906
    %939 = vst [vmem:[#allocation2 + $0x2c] sm:$0xf] %v907
    %940 = vst [vmem:[#allocation2 + $0x30] sm:$0xf] %v908
    %941 = vst [vmem:[#allocation2 + $0x34] sm:$0xf] %v909
    %942 = vst [vmem:[#allocation2 + $0x38] sm:$0xf] %v910
    %943 = vst [vmem:[#allocation2 + $0x3c] sm:$0xf] %v911
    // Predicated region
    $region38: #{tpu_custom_call.1} parent=1 // pred_check
      _
    $region39: #{tpu_custom_call.1} parent=1 // pred_check_branch
      %945 = sbr.rel (0) target = $region41
    $region40: #{tpu_custom_call.1} parent=1 // pred_region
      %s947 = ssub.s32 1024, 1024
      %948 = vsyncadd [#allocation3], %s947
      %s949 = sshll.u32 [#allocation2], 4
      %s950 = int_to_ptr.vmem [resolvable:$true] %s949
      %955 = dma.vmem_to_hbm [thread:$0]  %s950, 1024, %s9, [#allocation3], 64, 64, 4
    $region41: #{tpu_custom_call.1} parent=1 // pred_fallthru
      _
    // Predicated region
    $region42: #{tpu_custom_call.1} parent=1 // pred_check
      _
    $region43: #{tpu_custom_call.1} parent=1 // pred_check_branch
      %957 = sbr.rel (0) target = $region45
    $region44: #{tpu_custom_call.1} parent=1 // pred_region
      %958 = dma.done [#allocation3], 1024
    $region45: #{tpu_custom_call.1} parent=1 // pred_fallthru
      _
    %959 = vsyncpa [#allocation3], 1

</llo_original>
